<compile_context>
chip_gen: v7x
topology: tpu7x:2x2x1
jax: 0.10.0
libtpu: 0.0.40
codegen_flags: <defaults>
</compile_context>

<pallas_src>
from functools import partial

import jax
import jax.numpy as jnp
from jax.experimental import pallas as pl
from jax.experimental.pallas import tpu as pltpu

MULTI_DIST_CNT = 3
LANE = 128          # padded feature frame; every layer width here is <= 128
PRED_HID = 64       # fc_predict hidden width (fixed by the module)
N_W = 7             # number of 128-wide column slabs in the packed weight buffer
MAX_BT = 512        # batch-tile cap (keeps double-buffered blocks well inside VMEM)


def _round_up(x, m):
    return ((x + m - 1) // m) * m


def _choose_bt(B):
    if B < 128:
        return _round_up(max(B, 1), 8)          # one small tile
    # >= 2 grid steps so both v7x TensorCores get work; cap the tile at 512 rows.
    return min(_round_up(-(-B // 2), 8), MAX_BT)


def mixture_vae_kernel(x_ref, act_ref, eps_ref, u_ref, w_ref, b_ref, out_ref,
                       *, z_dim, output_dim):
    f32, bf16 = jnp.float32, jnp.bfloat16
    zc = MULTI_DIST_CNT * z_dim
    off_pi = 2 * zc
    off_dec = off_pi + MULTI_DIST_CNT
    off_z = off_dec + 2 * output_dim + 1

    bt = x_ref.shape[0]
    input_dim = x_ref.shape[1]
    action_dim = act_ref.shape[1]

    def wslab(k0, k1):                      # bf16 [128, (k1-k0)*128], zero-padded
        return w_ref[:, k0 * LANE:k1 * LANE]

    def brow(k):                            # f32 [1, 128], zero-padded
        return b_ref[k:k + 1, :]

    # ---- pack [preSt | preActCode | 0] into one 128-lane LHS frame ----
    xa = jnp.concatenate(
        [x_ref[...], act_ref[...],
         jnp.zeros((bt, LANE - input_dim - action_dim), f32)], axis=1).astype(bf16)

    # ---- stage 1 (fused): encoder fc1 | predictor act-branch ----
    s1 = jnp.dot(xa, wslab(0, 2), preferred_element_type=f32)        # [bt, 256]
    h = s1[:, 0:LANE] + brow(0)
    h = jnp.where(h >= 0.0, h, 0.01 * h)                             # leaky_relu
    act_proj = s1[:, LANE:2 * LANE]                                  # act @ Wp_act

    # ---- stage 2: fused heads -> enc = [mu_pre | log_var_pre | pi_pre | 0] ----
    enc = jnp.dot(h.astype(bf16), wslab(2, 3), preferred_element_type=f32) + brow(1)

    lane = jax.lax.broadcasted_iota(jnp.int32, (bt, LANE), 1)
    sig_f = jax.nn.sigmoid(enc)                                      # mu lanes
    tanh_f = jnp.tanh(enc)                                           # log_var / pi-logit lanes

    # exact 3-way softmax, in place on the 128-wide frame (zero outside the pi lanes)
    pi_mask = (lane >= off_pi) & (lane < off_dec)
    m = jnp.max(jnp.where(pi_mask, tanh_f, -1e30), axis=-1, keepdims=True)
    e = jnp.where(pi_mask, jnp.exp(tanh_f - m), 0.0)
    pi_f = e / jnp.sum(e, axis=-1, keepdims=True)

    # first output segment: [mu | log_var | pi]; zero for lanes >= off_dec
    enc_out = jnp.where(lane < zc, sig_f,
                        jnp.where(lane < off_pi, tanh_f, pi_f))

    # ---- reparameterize (f32) ----
    mu_s = sig_f[:, 0:zc]
    lv_s = tanh_f[:, zc:off_pi]
    z_all = eps_ref[...] * jnp.exp(0.5 * lv_s) + mu_s                # [bt, 3*z_dim]

    # inverse-CDF component pick from u ~ U(0,1) (emulates torch.multinomial(pi, 1))
    u = u_ref[...]                                                   # [bt, 1]
    c0 = pi_f[:, off_pi:off_pi + 1]
    c1 = c0 + pi_f[:, off_pi + 1:off_pi + 2]
    idx = (u >= c0).astype(jnp.int32) + (u >= c1).astype(jnp.int32)  # [bt, 1] in {0,1,2}

    lo = idx * z_dim
    glane = lane[:, 0:zc]
    z_masked = jnp.where((glane >= lo) & (glane < lo + z_dim), z_all, 0.0)

    # exact-f32 selected z (only the chosen group is nonzero -> fold by summing)
    z_sel = (z_masked[:, 0:z_dim] + z_masked[:, z_dim:2 * z_dim]
             + z_masked[:, 2 * z_dim:zc])                            # [bt, z_dim]

    # ---- stage 3 (fused, component-replicated weights): decoder fc1 | predictor z-branch ----
    z_frame = jnp.concatenate(
        [z_masked, jnp.zeros((bt, LANE - zc), f32)], axis=1).astype(bf16)
    s3 = jnp.dot(z_frame, wslab(3, 5), preferred_element_type=f32)   # [bt, 256]
    hd = jnp.maximum(s3[:, 0:LANE] + brow(2), 0.0)                   # decoder hidden (relu)
    hp = jnp.maximum(s3[:, LANE:2 * LANE] + act_proj + brow(3), 0.0)  # predictor hidden

    # ---- stage 4: recon | pred | reward land directly at their final output lanes ----
    # TODO(synk): the PyTorch `(rtn > 1e7).any()` debug prints are dropped (no output effect).
    tail = (jnp.dot(hd.astype(bf16), wslab(5, 6), preferred_element_type=f32)
            + jnp.dot(hp.astype(bf16), wslab(6, 7), preferred_element_type=f32)
            + brow(4))                                               # zero outside [off_dec, off_z)

    z_out = jnp.concatenate(
        [jnp.zeros((bt, off_z), f32), z_sel,
         jnp.zeros((bt, LANE - off_z - z_dim), f32)], axis=1)

    # single lane-dense [bt, 128] store: [ mu | log_var | pi | recon | pred | r | z | 0 ]
    out_ref[...] = enc_out + tail + z_out


def _linear_params(key, fan_in, fan_out):
    """PyTorch-style nn.Linear init; weight stored as [in, out], bias as [1, out]."""
    kw, kb = jax.random.split(key)
    bound = 1.0 / jnp.sqrt(float(fan_in))
    w = jax.random.uniform(kw, (fan_in, fan_out), jnp.float32, -bound, bound)
    b = jax.random.uniform(kb, (1, fan_out), jnp.float32, -bound, bound)
    return w, b


def init_params(key, input_dim, hidden_dim, z_dim, output_dim, action_code_dim):
    ks = jax.random.split(key, 9)
    p = {}
    p["w1"], p["b1"] = _linear_params(ks[0], input_dim, hidden_dim)
    p["wmu"], p["bmu"] = _linear_params(ks[1], hidden_dim, z_dim * MULTI_DIST_CNT)
    p["wlv"], p["blv"] = _linear_params(ks[2], hidden_dim, z_dim * MULTI_DIST_CNT)
    p["wpi"], p["bpi"] = _linear_params(ks[3], hidden_dim, MULTI_DIST_CNT)
    p["wd1"], p["bd1"] = _linear_params(ks[4], z_dim, hidden_dim)
    p["wdo"], p["bdo"] = _linear_params(ks[5], hidden_dim, output_dim)
    wp, p["bp"] = _linear_params(ks[6], z_dim + action_code_dim, PRED_HID)
    p["wpz"], p["wpa"] = wp[:z_dim], wp[z_dim:]          # split the concat(z, act) weight
    p["wpo"], p["bpo"] = _linear_params(ks[7], PRED_HID, output_dim)
    p["wr"], p["br"] = _linear_params(ks[8], PRED_HID, 1)
    return p


def pack_params(p):
    """Pack every Linear into one bf16 [128, 7*128] weight buffer + f32 [8, 128] biases.

    Column slabs (each 128 lanes wide): 0-1 stage1 (fc1 | act-branch), 2 encoder heads,
    3-4 stage3 (decoder fc1 | z-branch, rows replicated per mixture component),
    5-6 stage4 (decoder out | predictor out+reward) with columns pre-placed at their
    final output lanes so the kernel assembles the output slab with adds only.
    """
    input_dim, hidden_dim = p["w1"].shape
    zc = p["wmu"].shape[1]
    z_dim = zc // MULTI_DIST_CNT
    output_dim = p["wdo"].shape[1]
    action_dim = p["wpa"].shape[0]
    off_pi = 2 * zc
    off_dec = off_pi + MULTI_DIST_CNT
    off_z = off_dec + 2 * output_dim + 1
    assert input_dim + action_dim <= LANE and hidden_dim <= LANE
    assert zc <= LANE and off_z + z_dim <= LANE and PRED_HID <= LANE

    w = jnp.zeros((LANE, N_W * LANE), jnp.float32)
    # stage 1: [ vae_fc1 | fc_predict act-branch ]
    w = w.at[0:input_dim, 0:hidden_dim].set(p["w1"])
    w = w.at[input_dim:input_dim + action_dim, LANE:LANE + PRED_HID].set(p["wpa"])
    # stage 2: fused encoder heads [mu | log_var | pi]
    w = w.at[0:hidden_dim, 2 * LANE:2 * LANE + zc].set(p["wmu"])
    w = w.at[0:hidden_dim, 2 * LANE + zc:2 * LANE + 2 * zc].set(p["wlv"])
    w = w.at[0:hidden_dim, 2 * LANE + off_pi:2 * LANE + off_dec].set(p["wpi"])
    # stage 3: [ decoder fc1 | fc_predict z-branch ], rows replicated per component
    for k in range(MULTI_DIST_CNT):
        r0 = k * z_dim
        w = w.at[r0:r0 + z_dim, 3 * LANE:3 * LANE + hidden_dim].set(p["wd1"])
        w = w.at[r0:r0 + z_dim, 4 * LANE:4 * LANE + PRED_HID].set(p["wpz"])
    # stage 4: columns pre-placed at the final output lanes
    w = w.at[0:hidden_dim,
             5 * LANE + off_dec:5 * LANE + off_dec + output_dim].set(p["wdo"])
    w = w.at[0:PRED_HID,
             6 * LANE + off_dec + output_dim:
             6 * LANE + off_dec + 2 * output_dim].set(p["wpo"])
    w = w.at[0:PRED_HID,
             6 * LANE + off_dec + 2 * output_dim:6 * LANE + off_z].set(p["wr"])

    b = jnp.zeros((8, LANE), jnp.float32)
    b = b.at[0, 0:hidden_dim].set(p["b1"][0])
    b = b.at[1, 0:zc].set(p["bmu"][0])
    b = b.at[1, zc:2 * zc].set(p["blv"][0])
    b = b.at[1, off_pi:off_dec].set(p["bpi"][0])
    b = b.at[2, 0:hidden_dim].set(p["bd1"][0])
    b = b.at[3, 0:PRED_HID].set(p["bp"][0])
    b = b.at[4, off_dec:off_dec + output_dim].set(p["bdo"][0])
    b = b.at[4, off_dec + output_dim:off_dec + 2 * output_dim].set(p["bpo"][0])
    b = b.at[4, off_dec + 2 * output_dim:off_z].set(p["br"][0])
    return {"w": w.astype(jnp.bfloat16), "b": b}


def mixture_gaussian_vae_forward(packed, pre_st, pre_act_code, st, rng_key,
                                 *, z_dim, output_dim):
    B, input_dim = pre_st.shape
    action_dim = pre_act_code.shape[1]
    zc = MULTI_DIST_CNT * z_dim
    off_dec = 2 * zc + MULTI_DIST_CNT
    off_z = off_dec + 2 * output_dim + 1
    assert off_z + z_dim <= LANE and input_dim + action_dim <= LANE

    # TODO(synk): RNG stream differs from torch.randn_like / torch.multinomial (same
    # distributions); kept on the host (jax.random) for reproducibility — could move
    # in-kernel with pltpu.prng_seed/prng_random_bits for large-B training.
    k_eps, k_u = jax.random.split(rng_key)
    eps = jax.random.normal(k_eps, (B, zc), jnp.float32)
    u = jax.random.uniform(k_u, (B, 1), jnp.float32)

    bt = _choose_bt(B)
    Bp = _round_up(B, bt)
    xs = pre_st.astype(jnp.float32)
    acts = pre_act_code.astype(jnp.float32)
    epss, us = eps, u
    if Bp != B:
        padr = ((0, Bp - B), (0, 0))
        xs, acts, epss, us = (jnp.pad(a, padr) for a in (xs, acts, epss, us))

    out = pl.pallas_call(
        partial(mixture_vae_kernel, z_dim=z_dim, output_dim=output_dim),
        out_shape=jax.ShapeDtypeStruct((Bp, LANE), jnp.float32),
        grid=(Bp // bt,),
        in_specs=[
            pl.BlockSpec((bt, input_dim), lambda i: (i, 0)),
            pl.BlockSpec((bt, action_dim), lambda i: (i, 0)),
            pl.BlockSpec((bt, zc), lambda i: (i, 0)),
            pl.BlockSpec((bt, 1), lambda i: (i, 0)),
            pl.BlockSpec((LANE, N_W * LANE), lambda i: (0, 0)),
            pl.BlockSpec((8, LANE), lambda i: (0, 0)),
        ],
        out_specs=pl.BlockSpec((bt, LANE), lambda i: (i, 0)),
        compiler_params=pltpu.CompilerParams(
            dimension_semantics=("parallel",),
            vmem_limit_bytes=32 * 1024 * 1024),
    )(xs, acts, epss, us, packed["w"], packed["b"])

    mu = out[:B, 0:zc].reshape(B, MULTI_DIST_CNT, z_dim)
    log_var = out[:B, zc:2 * zc].reshape(B, MULTI_DIST_CNT, z_dim)
    pi = out[:B, 2 * zc:off_dec]
    recon = out[:B, off_dec:off_dec + output_dim]
    pred = out[:B, off_dec + output_dim:off_dec + 2 * output_dim]
    r = out[:B, off_dec + 2 * output_dim:off_z]
    z = out[:B, off_z:off_z + z_dim]
    return recon, mu, log_var, pi, pred, r, (z, st)


if __name__ == "__main__":
    # Small, module-consistent shapes.
    B, input_dim, hidden_dim, z_dim, output_dim, action_code_dim = 8, 16, 32, 8, 16, 4

    root = jax.random.PRNGKey(0)
    k_params, k_prest, k_act, k_st, k_fwd = jax.random.split(root, 5)

    params = init_params(k_params, input_dim, hidden_dim, z_dim, output_dim,
                         action_code_dim)
    packed = pack_params(params)
    pre_st = jax.random.normal(k_prest, (B, input_dim), jnp.float32)
    pre_act = jax.random.normal(k_act, (B, action_code_dim), jnp.float32)
    st = jax.random.normal(k_st, (B, input_dim), jnp.float32)

    fwd = jax.jit(partial(mixture_gaussian_vae_forward, z_dim=z_dim,
                          output_dim=output_dim))
    outs = fwd(packed, pre_st, pre_act, st, k_fwd)
    outs = jax.block_until_ready(outs)

    recon, mu, log_var, pi, pred_st, pred_r, (z, st_pass) = outs
    assert recon.shape == (B, output_dim)
    assert mu.shape == (B, MULTI_DIST_CNT, z_dim)
    assert log_var.shape == (B, MULTI_DIST_CNT, z_dim)
    assert pi.shape == (B, MULTI_DIST_CNT)
    assert pred_st.shape == (B, output_dim)
    assert pred_r.shape == (B, 1)
    assert z.shape == (B, z_dim)
    assert st_pass.shape == st.shape
    assert bool(jnp.all(jnp.isfinite(recon)))
    assert bool(jnp.all(jnp.isfinite(pred_st)))
    assert bool(jnp.all(jnp.isfinite(z)))
    assert bool(jnp.all(pi >= 0.0))
    assert bool(jnp.all(mu >= 0.0) and jnp.all(mu <= 1.0))
    assert bool(jnp.all(jnp.abs(log_var) <= 1.0))
    # exact-divide softmax: rows of pi sum to 1 at f32 accuracy
    assert bool(jnp.all(jnp.abs(jnp.sum(pi, axis=-1) - 1.0) < 1e-3))

    print("KERNEL_OK")
</pallas_src>

<mosaic_0001>
module attributes {stable_mosaic.version = 11 : i64} {
  func.func @mixture_vae_kernel(%arg0: i32, %arg1: memref<8x16xf32, #tpu.memory_space<vmem>>, %arg2: memref<8x4xf32, #tpu.memory_space<vmem>>, %arg3: memref<8x24xf32, #tpu.memory_space<vmem>>, %arg4: memref<8x1xf32, #tpu.memory_space<vmem>>, %arg5: memref<128x896xbf16, #tpu.memory_space<vmem>>, %arg6: memref<8x128xf32, #tpu.memory_space<vmem>>, %arg7: memref<8x128xf32, #tpu.memory_space<vmem>>) attributes {dimension_semantics = [#tpu.dimension_semantics<parallel>], iteration_bounds = array<i64: 1>, scalar_prefetch = 0 : i64, scratch_operands = 0 : i64, tpu.core_type = #tpu.core_type<tc>, window_params = [{transform_indices = @transform_0, window_bounds = array<i64: 8, 16>}, {transform_indices = @transform_1, window_bounds = array<i64: 8, 4>}, {transform_indices = @transform_2, window_bounds = array<i64: 8, 24>}, {transform_indices = @transform_3, window_bounds = array<i64: 8, 1>}, {pipeline_mode = #tpu.pipeline_mode<synchronous>, transform_indices = @transform_4, window_bounds = array<i64: 128, 896>}, {pipeline_mode = #tpu.pipeline_mode<synchronous>, transform_indices = @transform_5, window_bounds = array<i64: 8, 128>}, {transform_indices = @transform_6, window_bounds = array<i64: 8, 128>}]} {
    %c0 = arith.constant 0 : index
    %c0_0 = arith.constant 0 : index
    %0 = vector.load %arg1[%c0, %c0_0] : memref<8x16xf32, #tpu.memory_space<vmem>>, vector<8x16xf32>
    %c0_1 = arith.constant 0 : index
    %c0_2 = arith.constant 0 : index
    %1 = vector.load %arg2[%c0_1, %c0_2] : memref<8x4xf32, #tpu.memory_space<vmem>>, vector<8x4xf32>
    %cst = arith.constant 0.000000e+00 : f32
    %2 = vector.broadcast %cst : f32 to vector<8x108xf32>
    %3 = tpu.concatenate %0, %1, %2 in 1 : vector<8x16xf32>, vector<8x4xf32>, vector<8x108xf32> -> vector<8x128xf32>
    %4 = arith.truncf %3 : vector<8x128xf32> to vector<8x128xbf16>
    %c0_3 = arith.constant 0 : index
    %c0_4 = arith.constant 0 : index
    %5 = vector.load %arg5[%c0_3, %c0_4] : memref<128x896xbf16, #tpu.memory_space<vmem>>, vector<128x256xbf16>
    %cst_5 = arith.constant dense<0.000000e+00> : vector<8x256xf32>
    %6 = tpu.matmul %4, %5, %cst_5 {dimension_numbers = #tpu.dot_dimension_numbers<[1], [0], [0], [1], [0, 0, 1, 1], [], []>} : vector<8x128xbf16>, vector<128x256xbf16>, vector<8x256xf32> -> vector<8x256xf32>
    %7 = vector.extract_strided_slice %6 {offsets = [0, 0], sizes = [8, 128], strides = [1, 1]} : vector<8x256xf32> to vector<8x128xf32>
    %c0_6 = arith.constant 0 : index
    %c0_7 = arith.constant 0 : index
    %8 = vector.load %arg6[%c0_6, %c0_7] : memref<8x128xf32, #tpu.memory_space<vmem>>, vector<1x128xf32>
    %9 = vector.broadcast %8 : vector<1x128xf32> to vector<8x128xf32>
    %10 = arith.addf %7, %9 : vector<8x128xf32>
    %cst_8 = arith.constant 0.000000e+00 : f32
    %11 = vector.broadcast %cst_8 : f32 to vector<8x128xf32>
    %12 = arith.cmpf oge, %10, %11 : vector<8x128xf32>
    %cst_9 = arith.constant 0.00999999977 : f32
    %13 = vector.broadcast %cst_9 : f32 to vector<8x128xf32>
    %14 = arith.mulf %13, %10 : vector<8x128xf32>
    %15 = arith.select %12, %10, %14 : vector<8x128xi1>, vector<8x128xf32>
    %16 = vector.extract_strided_slice %6 {offsets = [0, 128], sizes = [8, 128], strides = [1, 1]} : vector<8x256xf32> to vector<8x128xf32>
    %17 = arith.truncf %15 : vector<8x128xf32> to vector<8x128xbf16>
    %c0_10 = arith.constant 0 : index
    %c256 = arith.constant 256 : index
    %18 = vector.load %arg5[%c0_10, %c256] : memref<128x896xbf16, #tpu.memory_space<vmem>>, vector<128x128xbf16>
    %cst_11 = arith.constant dense<0.000000e+00> : vector<8x128xf32>
    %19 = tpu.matmul %17, %18, %cst_11 {dimension_numbers = #tpu.dot_dimension_numbers<[1], [0], [0], [1], [0, 0, 1, 1], [], []>} : vector<8x128xbf16>, vector<128x128xbf16>, vector<8x128xf32> -> vector<8x128xf32>
    %c1 = arith.constant 1 : index
    %c0_12 = arith.constant 0 : index
    %20 = vector.load %arg6[%c1, %c0_12] : memref<8x128xf32, #tpu.memory_space<vmem>>, vector<1x128xf32>
    %21 = vector.broadcast %20 : vector<1x128xf32> to vector<8x128xf32>
    %22 = arith.addf %19, %21 : vector<8x128xf32>
    %23 = tpu.iota {dimensions = array<i32: 1>} : vector<8x128xi32>
    %24 = arith.negf %22 : vector<8x128xf32>
    %25 = math.exp %24 : vector<8x128xf32>
    %cst_13 = arith.constant 1.000000e+00 : f32
    %26 = vector.broadcast %cst_13 : f32 to vector<8x128xf32>
    %27 = arith.addf %26, %25 : vector<8x128xf32>
    %28 = arith.divf %26, %27 : vector<8x128xf32>
    %29 = math.tanh %22 : vector<8x128xf32>
    %c48_i32 = arith.constant 48 : i32
    %30 = vector.broadcast %c48_i32 : i32 to vector<8x128xi32>
    %31 = arith.cmpi sge, %23, %30 : vector<8x128xi32>
    %c51_i32 = arith.constant 51 : i32
    %32 = vector.broadcast %c51_i32 : i32 to vector<8x128xi32>
    %33 = arith.cmpi slt, %23, %32 : vector<8x128xi32>
    %34 = arith.andi %31, %33 : vector<8x128xi1>
    %cst_14 = arith.constant -1.000000e+30 : f32
    %35 = vector.broadcast %cst_14 : f32 to vector<8x128xf32>
    %36 = arith.select %34, %29, %35 : vector<8x128xi1>, vector<8x128xf32>
    %cst_15 = arith.constant dense<0xFF800000> : vector<8xf32>
    %37 = vector.multi_reduction <maximumf>, %36, %cst_15 [1] : vector<8x128xf32> to vector<8xf32>
    %38 = vector.shape_cast %37 : vector<8xf32> to vector<8x1xf32>
    %39 = vector.broadcast %38 : vector<8x1xf32> to vector<8x128xf32>
    %40 = arith.subf %29, %39 : vector<8x128xf32>
    %41 = math.exp %40 : vector<8x128xf32>
    %cst_16 = arith.constant 0.000000e+00 : f32
    %42 = vector.broadcast %cst_16 : f32 to vector<8x128xf32>
    %43 = arith.select %34, %41, %42 : vector<8x128xi1>, vector<8x128xf32>
    %cst_17 = arith.constant dense<0.000000e+00> : vector<8xf32>
    %44 = vector.multi_reduction <add>, %43, %cst_17 [1] : vector<8x128xf32> to vector<8xf32>
    %45 = vector.shape_cast %44 : vector<8xf32> to vector<8x1xf32>
    %46 = vector.broadcast %45 : vector<8x1xf32> to vector<8x128xf32>
    %47 = arith.divf %43, %46 : vector<8x128xf32>
    %c24_i32 = arith.constant 24 : i32
    %48 = vector.broadcast %c24_i32 : i32 to vector<8x128xi32>
    %49 = arith.cmpi slt, %23, %48 : vector<8x128xi32>
    %c48_i32_18 = arith.constant 48 : i32
    %50 = vector.broadcast %c48_i32_18 : i32 to vector<8x128xi32>
    %51 = arith.cmpi slt, %23, %50 : vector<8x128xi32>
    %52 = arith.select %51, %29, %47 : vector<8x128xi1>, vector<8x128xf32>
    %53 = arith.select %49, %28, %52 : vector<8x128xi1>, vector<8x128xf32>
    %54 = vector.extract_strided_slice %28 {offsets = [0, 0], sizes = [8, 24], strides = [1, 1]} : vector<8x128xf32> to vector<8x24xf32>
    %55 = vector.extract_strided_slice %29 {offsets = [0, 24], sizes = [8, 24], strides = [1, 1]} : vector<8x128xf32> to vector<8x24xf32>
    %c0_19 = arith.constant 0 : index
    %c0_20 = arith.constant 0 : index
    %56 = vector.load %arg3[%c0_19, %c0_20] : memref<8x24xf32, #tpu.memory_space<vmem>>, vector<8x24xf32>
    %cst_21 = arith.constant 5.000000e-01 : f32
    %57 = vector.broadcast %cst_21 : f32 to vector<8x24xf32>
    %58 = arith.mulf %57, %55 : vector<8x24xf32>
    %59 = math.exp %58 : vector<8x24xf32>
    %60 = arith.mulf %56, %59 : vector<8x24xf32>
    %61 = arith.addf %60, %54 : vector<8x24xf32>
    %c0_22 = arith.constant 0 : index
    %c0_23 = arith.constant 0 : index
    %62 = vector.load %arg4[%c0_22, %c0_23] : memref<8x1xf32, #tpu.memory_space<vmem>>, vector<8x1xf32>
    %63 = vector.extract_strided_slice %47 {offsets = [0, 48], sizes = [8, 1], strides = [1, 1]} : vector<8x128xf32> to vector<8x1xf32>
    %64 = vector.extract_strided_slice %47 {offsets = [0, 49], sizes = [8, 1], strides = [1, 1]} : vector<8x128xf32> to vector<8x1xf32>
    %65 = arith.addf %63, %64 : vector<8x1xf32>
    %66 = arith.cmpf oge, %62, %63 : vector<8x1xf32>
    %67 = arith.extui %66 : vector<8x1xi1> to vector<8x1xi32>
    %68 = arith.cmpf oge, %62, %65 : vector<8x1xf32>
    %69 = arith.extui %68 : vector<8x1xi1> to vector<8x1xi32>
    %70 = arith.addi %67, %69 : vector<8x1xi32>
    %c8_i32 = arith.constant 8 : i32
    %71 = vector.broadcast %c8_i32 : i32 to vector<8x1xi32>
    %72 = arith.muli %70, %71 : vector<8x1xi32>
    %73 = vector.extract_strided_slice %23 {offsets = [0, 0], sizes = [8, 24], strides = [1, 1]} : vector<8x128xi32> to vector<8x24xi32>
    %74 = vector.broadcast %72 : vector<8x1xi32> to vector<8x24xi32>
    %75 = arith.cmpi sge, %73, %74 : vector<8x24xi32>
    %c8_i32_24 = arith.constant 8 : i32
    %76 = vector.broadcast %c8_i32_24 : i32 to vector<8x1xi32>
    %77 = arith.addi %72, %76 : vector<8x1xi32>
    %78 = vector.broadcast %77 : vector<8x1xi32> to vector<8x24xi32>
    %79 = arith.cmpi slt, %73, %78 : vector<8x24xi32>
    %80 = arith.andi %75, %79 : vector<8x24xi1>
    %cst_25 = arith.constant 0.000000e+00 : f32
    %81 = vector.broadcast %cst_25 : f32 to vector<8x24xf32>
    %82 = arith.select %80, %61, %81 : vector<8x24xi1>, vector<8x24xf32>
    %83 = vector.extract_strided_slice %82 {offsets = [0, 0], sizes = [8, 8], strides = [1, 1]} : vector<8x24xf32> to vector<8x8xf32>
    %84 = vector.extract_strided_slice %82 {offsets = [0, 8], sizes = [8, 8], strides = [1, 1]} : vector<8x24xf32> to vector<8x8xf32>
    %85 = arith.addf %83, %84 : vector<8x8xf32>
    %86 = vector.extract_strided_slice %82 {offsets = [0, 16], sizes = [8, 8], strides = [1, 1]} : vector<8x24xf32> to vector<8x8xf32>
    %87 = arith.addf %85, %86 : vector<8x8xf32>
    %cst_26 = arith.constant 0.000000e+00 : f32
    %88 = vector.broadcast %cst_26 : f32 to vector<8x104xf32>
    %89 = tpu.concatenate %82, %88 in 1 : vector<8x24xf32>, vector<8x104xf32> -> vector<8x128xf32>
    %90 = arith.truncf %89 : vector<8x128xf32> to vector<8x128xbf16>
    %c0_27 = arith.constant 0 : index
    %c384 = arith.constant 384 : index
    %91 = vector.load %arg5[%c0_27, %c384] : memref<128x896xbf16, #tpu.memory_space<vmem>>, vector<128x256xbf16>
    %cst_28 = arith.constant dense<0.000000e+00> : vector<8x256xf32>
    %92 = tpu.matmul %90, %91, %cst_28 {dimension_numbers = #tpu.dot_dimension_numbers<[1], [0], [0], [1], [0, 0, 1, 1], [], []>} : vector<8x128xbf16>, vector<128x256xbf16>, vector<8x256xf32> -> vector<8x256xf32>
    %93 = vector.extract_strided_slice %92 {offsets = [0, 0], sizes = [8, 128], strides = [1, 1]} : vector<8x256xf32> to vector<8x128xf32>
    %c2 = arith.constant 2 : index
    %c0_29 = arith.constant 0 : index
    %94 = vector.load %arg6[%c2, %c0_29] : memref<8x128xf32, #tpu.memory_space<vmem>>, vector<1x128xf32>
    %95 = vector.broadcast %94 : vector<1x128xf32> to vector<8x128xf32>
    %96 = arith.addf %93, %95 : vector<8x128xf32>
    %cst_30 = arith.constant 0.000000e+00 : f32
    %97 = vector.broadcast %cst_30 : f32 to vector<8x128xf32>
    %98 = arith.maximumf %96, %97 : vector<8x128xf32>
    %99 = vector.extract_strided_slice %92 {offsets = [0, 128], sizes = [8, 128], strides = [1, 1]} : vector<8x256xf32> to vector<8x128xf32>
    %100 = arith.addf %99, %16 : vector<8x128xf32>
    %c3 = arith.constant 3 : index
    %c0_31 = arith.constant 0 : index
    %101 = vector.load %arg6[%c3, %c0_31] : memref<8x128xf32, #tpu.memory_space<vmem>>, vector<1x128xf32>
    %102 = vector.broadcast %101 : vector<1x128xf32> to vector<8x128xf32>
    %103 = arith.addf %100, %102 : vector<8x128xf32>
    %cst_32 = arith.constant 0.000000e+00 : f32
    %104 = vector.broadcast %cst_32 : f32 to vector<8x128xf32>
    %105 = arith.maximumf %103, %104 : vector<8x128xf32>
    %106 = arith.truncf %98 : vector<8x128xf32> to vector<8x128xbf16>
    %c0_33 = arith.constant 0 : index
    %c640 = arith.constant 640 : index
    %107 = vector.load %arg5[%c0_33, %c640] : memref<128x896xbf16, #tpu.memory_space<vmem>>, vector<128x128xbf16>
    %cst_34 = arith.constant dense<0.000000e+00> : vector<8x128xf32>
    %108 = tpu.matmul %106, %107, %cst_34 {dimension_numbers = #tpu.dot_dimension_numbers<[1], [0], [0], [1], [0, 0, 1, 1], [], []>} : vector<8x128xbf16>, vector<128x128xbf16>, vector<8x128xf32> -> vector<8x128xf32>
    %109 = arith.truncf %105 : vector<8x128xf32> to vector<8x128xbf16>
    %c0_35 = arith.constant 0 : index
    %c768 = arith.constant 768 : index
    %110 = vector.load %arg5[%c0_35, %c768] : memref<128x896xbf16, #tpu.memory_space<vmem>>, vector<128x128xbf16>
    %cst_36 = arith.constant dense<0.000000e+00> : vector<8x128xf32>
    %111 = tpu.matmul %109, %110, %cst_36 {dimension_numbers = #tpu.dot_dimension_numbers<[1], [0], [0], [1], [0, 0, 1, 1], [], []>} : vector<8x128xbf16>, vector<128x128xbf16>, vector<8x128xf32> -> vector<8x128xf32>
    %112 = arith.addf %108, %111 : vector<8x128xf32>
    %c4 = arith.constant 4 : index
    %c0_37 = arith.constant 0 : index
    %113 = vector.load %arg6[%c4, %c0_37] : memref<8x128xf32, #tpu.memory_space<vmem>>, vector<1x128xf32>
    %114 = vector.broadcast %113 : vector<1x128xf32> to vector<8x128xf32>
    %115 = arith.addf %112, %114 : vector<8x128xf32>
    %cst_38 = arith.constant 0.000000e+00 : f32
    %116 = vector.broadcast %cst_38 : f32 to vector<8x84xf32>
    %cst_39 = arith.constant 0.000000e+00 : f32
    %117 = vector.broadcast %cst_39 : f32 to vector<8x36xf32>
    %118 = tpu.concatenate %116, %87, %117 in 1 : vector<8x84xf32>, vector<8x8xf32>, vector<8x36xf32> -> vector<8x128xf32>
    %119 = arith.addf %53, %115 : vector<8x128xf32>
    %120 = arith.addf %119, %118 : vector<8x128xf32>
    %c0_40 = arith.constant 0 : index
    %c0_41 = arith.constant 0 : index
    %121 = vector.load %arg7[%c0_40, %c0_41] : memref<8x128xf32, #tpu.memory_space<vmem>>, vector<8x128xf32>
    tpu.vector_store %arg7[%c0_40, %c0_41], %120 {strides = array<i32>} : memref<8x128xf32, #tpu.memory_space<vmem>>, vector<8x128xf32>,
    return
  }
  func.func @transform_0(%arg0: i32) -> (i32, i32) {
    %c0_i32 = arith.constant 0 : i32
    %c0_i32_0 = arith.constant 0 : i32
    return %arg0, %c0_i32 : i32, i32
  }
  func.func @transform_1(%arg0: i32) -> (i32, i32) {
    %c0_i32 = arith.constant 0 : i32
    %c0_i32_0 = arith.constant 0 : i32
    return %arg0, %c0_i32 : i32, i32
  }
  func.func @transform_2(%arg0: i32) -> (i32, i32) {
    %c0_i32 = arith.constant 0 : i32
    %c0_i32_0 = arith.constant 0 : i32
    return %arg0, %c0_i32 : i32, i32
  }
  func.func @transform_3(%arg0: i32) -> (i32, i32) {
    %c0_i32 = arith.constant 0 : i32
    %c0_i32_0 = arith.constant 0 : i32
    return %arg0, %c0_i32 : i32, i32
  }
  func.func @transform_4(%arg0: i32) -> (i32, i32) {
    %c0_i32 = arith.constant 0 : i32
    %c0_i32_0 = arith.constant 0 : i32
    %c0_i32_1 = arith.constant 0 : i32
    return %c0_i32, %c0_i32_0 : i32, i32
  }
  func.func @transform_5(%arg0: i32) -> (i32, i32) {
    %c0_i32 = arith.constant 0 : i32
    %c0_i32_0 = arith.constant 0 : i32
    %c0_i32_1 = arith.constant 0 : i32
    return %c0_i32, %c0_i32_0 : i32, i32
  }
  func.func @transform_6(%arg0: i32) -> (i32, i32) {
    %c0_i32 = arith.constant 0 : i32
    %c0_i32_0 = arith.constant 0 : i32
    return %arg0, %c0_i32 : i32, i32
  }
}

</mosaic_0001>

<llo_original>
// kernel: mixture_gaussian_vae_forward.3
$region0: #{mixture_gaussian_vae_forward.3}
  #allocation0 [shape = 'u32[]', space=smem, size = 0x4, offset = 0x4, fixed_abs, tag = 'smem constant byte address 0x4 - core index']
  #allocation1 [shape = 'u32[144,128]{1,0:T(1,128)}', space=vmem, size = 0x12000, scoped, tag = 'internal scratch']
  %s0 = inlined_call_operand.vmem [shape: f32[8,16], index: 0, kind: input, shape index: {}]
  %s1 = inlined_call_operand.vmem [shape: f32[8,4], index: 1, kind: input, shape index: {}]
  %s2 = inlined_call_operand.vmem [shape: f32[8,24], index: 2, kind: input, shape index: {}]
  %s3 = inlined_call_operand.vmem [shape: f32[8,1], index: 3, kind: input, shape index: {}]
  %s4 = inlined_call_operand.hbm [shape: bf16[128,896], index: 4, kind: input, shape index: {}]
  %s5 = inlined_call_operand.vmem [shape: f32[8,128], index: 5, kind: input, shape index: {}]
  %s6 = inlined_call_operand.vmem [shape: f32[8,128], index: 6, kind: output, shape index: {}]
  %s7 = sld [smem:[#allocation0]]
  $region38: #{mixture_gaussian_vae_forward.3} parent=0
    _
  %s9 = ssub.s32 1, %s7
  %s10 = scalar_select 0, %s9, %s7
  $region1: #{mixture_gaussian_vae_forward.3} parent=0
    #allocation2 [shape = 'u8[229376]{0}', space=vmem, size = 0x38000, scoped, tag = 'input window, operand 4, single buffered']
    #allocation3 [shape = 's32[1]{0}', space=sflag, size = 0x4, scoped, tag = 'scoped memory for mixture_gaussian_vae_forward.3']
    %11 = vsyncpa [#allocation3], 0
    // Predicated region
    $region2: #{mixture_gaussian_vae_forward.3} parent=1 // pred_check
      _
    $region3: #{mixture_gaussian_vae_forward.3} parent=1 // pred_check_branch
      %13 = sbr.rel (0) target = $region5
    $region4: #{mixture_gaussian_vae_forward.3} parent=1 // pred_region
      _
    $region5: #{mixture_gaussian_vae_forward.3} parent=1 // pred_fallthru
      _
    // Predicated region
    $region6: #{mixture_gaussian_vae_forward.3} parent=1 // pred_check
      _
    $region7: #{mixture_gaussian_vae_forward.3} parent=1 // pred_check_branch
      %15 = sbr.rel (0) target = $region9
    $region8: #{mixture_gaussian_vae_forward.3} parent=1 // pred_region
      _
    $region9: #{mixture_gaussian_vae_forward.3} parent=1 // pred_fallthru
      _
    // Predicated region
    $region10: #{mixture_gaussian_vae_forward.3} parent=1 // pred_check
      _
    $region11: #{mixture_gaussian_vae_forward.3} parent=1 // pred_check_branch
      %17 = sbr.rel (0) target = $region13
    $region12: #{mixture_gaussian_vae_forward.3} parent=1 // pred_region
      _
    $region13: #{mixture_gaussian_vae_forward.3} parent=1 // pred_fallthru
      _
    // Predicated region
    $region14: #{mixture_gaussian_vae_forward.3} parent=1 // pred_check
      _
    $region15: #{mixture_gaussian_vae_forward.3} parent=1 // pred_check_branch
      %19 = sbr.rel (0) target = $region17
    $region16: #{mixture_gaussian_vae_forward.3} parent=1 // pred_region
      _
    $region17: #{mixture_gaussian_vae_forward.3} parent=1 // pred_fallthru
      _
    // Predicated region
    $region18: #{mixture_gaussian_vae_forward.3} parent=1 // pred_check
      _
    $region19: #{mixture_gaussian_vae_forward.3} parent=1 // pred_check_branch
      %21 = sbr.rel (0) target = $region21
    $region20: #{mixture_gaussian_vae_forward.3} parent=1 // pred_region
      %s23 = ssub.s32 7168, 7168
      %24 = vsyncadd [#allocation3], %s23
      %s25 = sshll.u32 [#allocation2], 4
      %s26 = int_to_ptr.vmem [resolvable:$true] %s25
      %31 = dma.hbm_to_vmem [thread:$0]  %s4, 7168, %s26, [#allocation3], 448, 448, 28
    $region21: #{mixture_gaussian_vae_forward.3} parent=1 // pred_fallthru
      _
    // Predicated region
    $region22: #{mixture_gaussian_vae_forward.3} parent=1 // pred_check
      _
    $region23: #{mixture_gaussian_vae_forward.3} parent=1 // pred_check_branch
      %33 = sbr.rel (0) target = $region25
    $region24: #{mixture_gaussian_vae_forward.3} parent=1 // pred_region
      _
    $region25: #{mixture_gaussian_vae_forward.3} parent=1 // pred_fallthru
      _
    // Predicated region
    $region26: #{mixture_gaussian_vae_forward.3} parent=1 // pred_check
      _
    $region27: #{mixture_gaussian_vae_forward.3} parent=1 // pred_check_branch
      %35 = sbr.rel (0) target = $region29
    $region28: #{mixture_gaussian_vae_forward.3} parent=1 // pred_region
      %36 = dma.done [#allocation3], 7168
    $region29: #{mixture_gaussian_vae_forward.3} parent=1 // pred_fallthru
      _
    %v38 = vld [vmem:[%s0] sm:$0xff]
    %v39 = vld [vmem:[%s1] sm:$0xff]
    %41 = vrot.lane.b32.xlu0 %v39, 16
    %v42 = vpop.permute.xlu0 %41
    %vm44 = vcmask 130048
    %v45 = vsel %vm44, %v38, %v42
    %vm46 = vcmask 162816
    %v47 = vsel %vm46, %v45, 0.0
    %v48 = vpack.c.bf16 %v47, %v47
    %v49 = vld [vmem:[#allocation2] sm:$0xff]
    %v50 = vld [vmem:[#allocation2 + $0x1c] sm:$0xff]
    %v51 = vld [vmem:[#allocation2 + $0x38] sm:$0xff]
    %v52 = vld [vmem:[#allocation2 + $0x54] sm:$0xff]
    %v53 = vld [vmem:[#allocation2 + $0x70] sm:$0xff]
    %v54 = vld [vmem:[#allocation2 + $0x8c] sm:$0xff]
    %v55 = vld [vmem:[#allocation2 + $0xa8] sm:$0xff]
    %v56 = vld [vmem:[#allocation2 + $0xc4] sm:$0xff]
    %v57 = vld [vmem:[#allocation2 + $0xe0] sm:$0xff]
    %v58 = vld [vmem:[#allocation2 + $0xfc] sm:$0xff]
    %v59 = vld [vmem:[#allocation2 + $0x118] sm:$0xff]
    %v60 = vld [vmem:[#allocation2 + $0x134] sm:$0xff]
    %v61 = vld [vmem:[#allocation2 + $0x150] sm:$0xff]
    %v62 = vld [vmem:[#allocation2 + $0x16c] sm:$0xff]
    %v63 = vld [vmem:[#allocation2 + $0x188] sm:$0xff]
    %v64 = vld [vmem:[#allocation2 + $0x1a4] sm:$0xff]
    %v81 = vunpack.c.l.b16 %v49
    %v82 = vunpack.c.h.b16 %v49
    %v83 = vunpack.c.l.b16 %v50
    %v84 = vunpack.c.h.b16 %v50
    %v85 = vunpack.c.l.b16 %v51
    %v86 = vunpack.c.h.b16 %v51
    %v87 = vunpack.c.l.b16 %v52
    %v88 = vunpack.c.h.b16 %v52
    %v89 = vunpack.c.l.b16 %v53
    %v90 = vunpack.c.h.b16 %v53
    %v91 = vunpack.c.l.b16 %v54
    %v92 = vunpack.c.h.b16 %v54
    %v93 = vunpack.c.l.b16 %v55
    %v94 = vunpack.c.h.b16 %v55
    %v95 = vunpack.c.l.b16 %v56
    %v96 = vunpack.c.h.b16 %v56
    %v97 = vunpack.c.l.b16 %v57
    %v98 = vunpack.c.h.b16 %v57
    %v99 = vunpack.c.l.b16 %v58
    %v100 = vunpack.c.h.b16 %v58
    %v101 = vunpack.c.l.b16 %v59
    %v102 = vunpack.c.h.b16 %v59
    %v103 = vunpack.c.l.b16 %v60
    %v104 = vunpack.c.h.b16 %v60
    %v105 = vunpack.c.l.b16 %v61
    %v106 = vunpack.c.h.b16 %v61
    %v107 = vunpack.c.l.b16 %v62
    %v108 = vunpack.c.h.b16 %v62
    %v109 = vunpack.c.l.b16 %v63
    %v110 = vunpack.c.h.b16 %v63
    %v111 = vunpack.c.l.b16 %v64
    %v112 = vunpack.c.h.b16 %v64
    %v113 = vpack.c.b16 %v83, %v81
    %v114 = vpack.c.b16 %v84, %v82
    %v115 = vpack.c.b16 %v87, %v85
    %v116 = vpack.c.b16 %v88, %v86
    %v117 = vpack.c.b16 %v91, %v89
    %v118 = vpack.c.b16 %v92, %v90
    %v119 = vpack.c.b16 %v95, %v93
    %v120 = vpack.c.b16 %v96, %v94
    %v121 = vpack.c.b16 %v99, %v97
    %v122 = vpack.c.b16 %v100, %v98
    %v123 = vpack.c.b16 %v103, %v101
    %v124 = vpack.c.b16 %v104, %v102
    %v125 = vpack.c.b16 %v107, %v105
    %v126 = vpack.c.b16 %v108, %v106
    %v127 = vpack.c.b16 %v111, %v109
    %v128 = vpack.c.b16 %v112, %v110
    %145 = vmatprep.subr.bf16.mxu0 %v114
    %146 = vmatpush1.bf16.msra.mxu0 %v113
    %147 = vmatprep.subr.bf16.mxu0 %v116
    %148 = vmatpush1.bf16.msra.mxu0 %v115
    %149 = vmatprep.subr.bf16.mxu0 %v118
    %150 = vmatpush1.bf16.msra.mxu0 %v117
    %151 = vmatprep.subr.bf16.mxu0 %v120
    %152 = vmatpush1.bf16.msra.mxu0 %v119
    %153 = vmatprep.subr.bf16.mxu0 %v122
    %154 = vmatpush1.bf16.msra.mxu0 %v121
    %155 = vmatprep.subr.bf16.mxu0 %v124
    %156 = vmatpush1.bf16.msra.mxu0 %v123
    %157 = vmatprep.subr.bf16.mxu0 %v126
    %158 = vmatpush1.bf16.msra.mxu0 %v125
    %159 = vmatprep.subr.bf16.mxu0 %v128
    %160 = vmatpush1.bf16.msra.mxu0 %v127
    %161 = vmatprep.subr.bf16.mxu0 0
    %162 = vmatpush1.bf16.msra.mxu0 0
    %163 = vmatprep.subr.bf16.mxu0 0
    %164 = vmatpush1.bf16.msra.mxu0 0
    %165 = vmatprep.subr.bf16.mxu0 0
    %166 = vmatpush1.bf16.msra.mxu0 0
    %167 = vmatprep.subr.bf16.mxu0 0
    %168 = vmatpush1.bf16.msra.mxu0 0
    %169 = vmatprep.subr.bf16.mxu0 0
    %170 = vmatpush1.bf16.msra.mxu0 0
    %171 = vmatprep.subr.bf16.mxu0 0
    %172 = vmatpush1.bf16.msra.mxu0 0
    %173 = vmatprep.subr.bf16.mxu0 0
    %174 = vmatpush1.bf16.msra.mxu0 0
    %175 = vmatprep.subr.bf16.mxu0 0
    %176 = vmatpush1.bf16.msra.mxu0 0
    %177 = vmatprep.mubr.bf16.mxu0 0
    %178 = vmatmul.mubr.bf16.gmra.mrb[0].mxu0 %v48
    %v179 = vpop.f32.mrb[0].mxu0
    %v180 = vadd.f32 0.0, %v179
    %v181 = vpop.f32.mrb[0].mxu0
    %v182 = vadd.f32 0.0, %v181
    %v183 = vpop.f32.mrb[0].mxu0
    %v184 = vpop.f32.mrb[0].mxu0
    %185 = vdwg.mxu0
    %v186 = vld [vmem:[%s5] sm:$0x1]
    %v187 = vlaneseq
    %v188 = vshrl.u32 %v187, 7
    %v189 = vsub.s32 0, %v188
    %v190 = vrot.slane %v186, %v189
    %v191 = vadd.f32 %v180, %v190
    %vm192 = vcmp.ge.f32.partialorder %v191, 0.0
    %v193 = vmul.f32 %v191, 0.01
    %v194 = vsel %vm192, %v191, %v193
    %v195 = vpack.c.bf16 %v194, %v194
    %v196 = vld [vmem:[#allocation2 + $0x8] sm:$0xf]
    %v197 = vld [vmem:[#allocation2 + $0x24] sm:$0xf]
    %v198 = vld [vmem:[#allocation2 + $0x40] sm:$0xf]
    %v199 = vld [vmem:[#allocation2 + $0x5c] sm:$0xf]
    %v200 = vld [vmem:[#allocation2 + $0x78] sm:$0xf]
    %v201 = vld [vmem:[#allocation2 + $0x94] sm:$0xf]
    %v202 = vld [vmem:[#allocation2 + $0xb0] sm:$0xf]
    %v203 = vld [vmem:[#allocation2 + $0xcc] sm:$0xf]
    %v204 = vld [vmem:[#allocation2 + $0xe8] sm:$0xf]
    %v205 = vld [vmem:[#allocation2 + $0x104] sm:$0xf]
    %v206 = vld [vmem:[#allocation2 + $0x120] sm:$0xf]
    %v207 = vld [vmem:[#allocation2 + $0x13c] sm:$0xf]
    %v208 = vld [vmem:[#allocation2 + $0x158] sm:$0xf]
    %v209 = vld [vmem:[#allocation2 + $0x174] sm:$0xf]
    %v210 = vld [vmem:[#allocation2 + $0x190] sm:$0xf]
    %v211 = vld [vmem:[#allocation2 + $0x1ac] sm:$0xf]
    %v212 = vld [vmem:[%s5 + $0x1] sm:$0x1]
    %v213 = vlaneseq
    %v214 = vshrl.u32 %v213, 7
    %v215 = vsub.s32 0, %v214
    %v216 = vrot.slane %v212, %v215
    %v233 = vunpack.c.l.b16 %v196
    %v234 = vunpack.c.l.b16 %v197
    %v235 = vunpack.c.l.b16 %v198
    %v236 = vunpack.c.l.b16 %v199
    %v237 = vunpack.c.l.b16 %v200
    %v238 = vunpack.c.l.b16 %v201
    %v239 = vunpack.c.l.b16 %v202
    %v240 = vunpack.c.l.b16 %v203
    %v241 = vunpack.c.l.b16 %v204
    %v242 = vunpack.c.l.b16 %v205
    %v243 = vunpack.c.l.b16 %v206
    %v244 = vunpack.c.l.b16 %v207
    %v245 = vunpack.c.l.b16 %v208
    %v246 = vunpack.c.l.b16 %v209
    %v247 = vunpack.c.l.b16 %v210
    %v248 = vunpack.c.l.b16 %v211
    %v249 = vpack.c.b16 %v234, %v233
    %v250 = vpack.c.b16 %v236, %v235
    %v251 = vpack.c.b16 %v238, %v237
    %v252 = vpack.c.b16 %v240, %v239
    %v253 = vpack.c.b16 %v242, %v241
    %v254 = vpack.c.b16 %v244, %v243
    %v255 = vpack.c.b16 %v246, %v245
    %v256 = vpack.c.b16 %v248, %v247
    %265 = vmatprep.subr.bf16.mxu0 0
    %266 = vmatpush1.bf16.msra.mxu0 %v249
    %267 = vmatprep.subr.bf16.mxu0 0
    %268 = vmatpush1.bf16.msra.mxu0 %v250
    %269 = vmatprep.subr.bf16.mxu0 0
    %270 = vmatpush1.bf16.msra.mxu0 %v251
    %271 = vmatprep.subr.bf16.mxu0 0
    %272 = vmatpush1.bf16.msra.mxu0 %v252
    %273 = vmatprep.subr.bf16.mxu0 0
    %274 = vmatpush1.bf16.msra.mxu0 %v253
    %275 = vmatprep.subr.bf16.mxu0 0
    %276 = vmatpush1.bf16.msra.mxu0 %v254
    %277 = vmatprep.subr.bf16.mxu0 0
    %278 = vmatpush1.bf16.msra.mxu0 %v255
    %279 = vmatprep.subr.bf16.mxu0 0
    %280 = vmatpush1.bf16.msra.mxu0 %v256
    %281 = vmatprep.subr.bf16.mxu0 0
    %282 = vmatpush1.bf16.msra.mxu0 0
    %283 = vmatprep.subr.bf16.mxu0 0
    %284 = vmatpush1.bf16.msra.mxu0 0
    %285 = vmatprep.subr.bf16.mxu0 0
    %286 = vmatpush1.bf16.msra.mxu0 0
    %287 = vmatprep.subr.bf16.mxu0 0
    %288 = vmatpush1.bf16.msra.mxu0 0
    %289 = vmatprep.subr.bf16.mxu0 0
    %290 = vmatpush1.bf16.msra.mxu0 0
    %291 = vmatprep.subr.bf16.mxu0 0
    %292 = vmatpush1.bf16.msra.mxu0 0
    %293 = vmatprep.subr.bf16.mxu0 0
    %294 = vmatpush1.bf16.msra.mxu0 0
    %295 = vmatprep.subr.bf16.mxu0 0
    %296 = vmatpush1.bf16.msra.mxu0 0
    %297 = vmatprep.mubr.bf16.mxu0 0
    %298 = vmatmul.mubr.bf16.gmra.mrb[0].mxu0 %v195
    %v299 = vpop.f32.mrb[0].mxu0
    %v300 = vadd.f32 %v216, %v299
    %v301 = vpop.f32.mrb[0].mxu0
    %v302 = vpop.f32.mrb[0].mxu0
    %v303 = vpop.f32.mrb[0].mxu0
    %304 = vdwg.mxu0
    %v305 = vlaneseq
    %v306 = vand.u32 %v305, 127
    %v307 = vxor.u32 %v300, 2147483648
    %v308 = vmul.f32 %v307, 1.442695
    %v309 = vpow.pop %v308
    %v310 = vadd.f32 %v309, 1.0
    %v311 = vrcp.pop %v310
    %v312 = vmul.f32 1.0, %v311
    %v313 = vtanh.pop %v300
    %vm314 = vcmp.ge.s32.totalorder %v306, 48
    %vm315 = vcmp.lt.s32.totalorder %v306, 51
    %vm316 = vmand %vm314, %vm315
    %v317 = vsel %vm316, %v313, -1e+30
    %318 = vmax.xlane.f32.xlu0 %v317
    %v319 = vpop.xlane.xlu0 %318
    %v320 = vsub.f32 %v313, %v319
    %v321 = vmul.f32 %v320, 1.442695
    %v322 = vpow.pop %v321
    %v323 = vsel %vm316, %v322, 0.0
    %324 = vadd.xlane.f32.xlu0 %v323
    %v325 = vpop.xlane.xlu0 %324
    %v326 = vrcp.pop %v325
    %v327 = vmul.f32 %v323, %v326
    %vm328 = vcmp.lt.s32.totalorder %v306, 24
    %vm329 = vcmp.lt.s32.totalorder %v306, 48
    %v330 = vsel %vm329, %v313, %v327
    %v331 = vsel %vm328, %v312, %v330
    %v332 = vld [vmem:[%s2] sm:$0xff]
    %v333 = vmul.f32 %v313, 0.5
    %v334 = vmul.f32 %v333, 1.442695
    %v335 = vpow.pop %v334
    %337 = vrot.lane.b32.xlu0 %v335, 104
    %v338 = vpop.permute.xlu0 %337
    %v340 = vmul.f32 %v332, %v338
    %v341 = vadd.f32 %v340, %v312
    %v342 = vld [vmem:[%s3] sm:$0xff]
    %344 = vrot.lane.b32.xlu0 %v327, 127
    %v345 = vpop.permute.xlu0 %344
    %v347 = vadd.f32 %v327, %v345
    %348 = vrot.lane.b32.xlu0 %v327, 80
    %v349 = vpop.permute.xlu0 %348
    %vm351 = vcmp.ge.f32.partialorder %v342, %v349
    %v352 = vsel %vm351, 1, 0
    %354 = vrot.lane.b32.xlu0 %v347, 80
    %v355 = vpop.permute.xlu0 %354
    %vm357 = vcmp.ge.f32.partialorder %v342, %v355
    %v358 = vsel %vm357, 1, 0
    %v359 = vadd.s32 %v352, %v358
    %v360 = vmul.u32 %v359, 8
    %361 = vset.pattern.permute.xlu0 0
    %362 = vperm.xlu0 %361, %v360
    %v363 = vpop.permute.xlu0 %362
    %vm364 = vcmp.ge.s32.totalorder %v306, %v363
    %v365 = vadd.s32 %v360, 8
    %366 = vset.pattern.permute.xlu0 0
    %367 = vperm.xlu0 %366, %v365
    %v368 = vpop.permute.xlu0 %367
    %vm369 = vcmp.lt.s32.totalorder %v306, %v368
    %vm370 = vmand %vm364, %vm369
    %v371 = vsel %vm370, %v341, 0.0
    %373 = vrot.lane.b32.xlu0 %v371, 120
    %v374 = vpop.permute.xlu0 %373
    %v376 = vadd.f32 %v371, %v374
    %377 = vrot.lane.b32.xlu0 %v371, 112
    %v378 = vpop.permute.xlu0 %377
    %v380 = vadd.f32 %v376, %v378
    %vm381 = vcmask 195584
    %v382 = vsel %vm381, %v371, 0.0
    %v383 = vpack.c.bf16 %v382, %v382
    %v384 = vld [vmem:[#allocation2 + $0xc] sm:$0xff]
    %v385 = vld [vmem:[#allocation2 + $0x28] sm:$0xff]
    %v386 = vld [vmem:[#allocation2 + $0x44] sm:$0xff]
    %v387 = vld [vmem:[#allocation2 + $0x60] sm:$0xff]
    %v388 = vld [vmem:[#allocation2 + $0x7c] sm:$0xff]
    %v389 = vld [vmem:[#allocation2 + $0x98] sm:$0xff]
    %v390 = vld [vmem:[#allocation2 + $0xb4] sm:$0xff]
    %v391 = vld [vmem:[#allocation2 + $0xd0] sm:$0xff]
    %v392 = vld [vmem:[#allocation2 + $0xec] sm:$0xff]
    %v393 = vld [vmem:[#allocation2 + $0x108] sm:$0xff]
    %v394 = vld [vmem:[#allocation2 + $0x124] sm:$0xff]
    %v395 = vld [vmem:[#allocation2 + $0x140] sm:$0xff]
    %v396 = vld [vmem:[#allocation2 + $0x15c] sm:$0xff]
    %v397 = vld [vmem:[#allocation2 + $0x178] sm:$0xff]
    %v398 = vld [vmem:[#allocation2 + $0x194] sm:$0xff]
    %v399 = vld [vmem:[#allocation2 + $0x1b0] sm:$0xff]
    %v416 = vunpack.c.l.b16 %v384
    %v417 = vunpack.c.h.b16 %v384
    %v418 = vunpack.c.l.b16 %v385
    %v419 = vunpack.c.h.b16 %v385
    %v420 = vunpack.c.l.b16 %v386
    %v421 = vunpack.c.h.b16 %v386
    %v422 = vunpack.c.l.b16 %v387
    %v423 = vunpack.c.h.b16 %v387
    %v424 = vunpack.c.l.b16 %v388
    %v425 = vunpack.c.h.b16 %v388
    %v426 = vunpack.c.l.b16 %v389
    %v427 = vunpack.c.h.b16 %v389
    %v428 = vunpack.c.l.b16 %v390
    %v429 = vunpack.c.h.b16 %v390
    %v430 = vunpack.c.l.b16 %v391
    %v431 = vunpack.c.h.b16 %v391
    %v432 = vunpack.c.l.b16 %v392
    %v433 = vunpack.c.h.b16 %v392
    %v434 = vunpack.c.l.b16 %v393
    %v435 = vunpack.c.h.b16 %v393
    %v436 = vunpack.c.l.b16 %v394
    %v437 = vunpack.c.h.b16 %v394
    %v438 = vunpack.c.l.b16 %v395
    %v439 = vunpack.c.h.b16 %v395
    %v440 = vunpack.c.l.b16 %v396
    %v441 = vunpack.c.h.b16 %v396
    %v442 = vunpack.c.l.b16 %v397
    %v443 = vunpack.c.h.b16 %v397
    %v444 = vunpack.c.l.b16 %v398
    %v445 = vunpack.c.h.b16 %v398
    %v446 = vunpack.c.l.b16 %v399
    %v447 = vunpack.c.h.b16 %v399
    %v448 = vpack.c.b16 %v418, %v416
    %v449 = vpack.c.b16 %v419, %v417
    %v450 = vpack.c.b16 %v422, %v420
    %v451 = vpack.c.b16 %v423, %v421
    %v452 = vpack.c.b16 %v426, %v424
    %v453 = vpack.c.b16 %v427, %v425
    %v454 = vpack.c.b16 %v430, %v428
    %v455 = vpack.c.b16 %v431, %v429
    %v456 = vpack.c.b16 %v434, %v432
    %v457 = vpack.c.b16 %v435, %v433
    %v458 = vpack.c.b16 %v438, %v436
    %v459 = vpack.c.b16 %v439, %v437
    %v460 = vpack.c.b16 %v442, %v440
    %v461 = vpack.c.b16 %v443, %v441
    %v462 = vpack.c.b16 %v446, %v444
    %v463 = vpack.c.b16 %v447, %v445
    %480 = vmatprep.subr.bf16.mxu0 %v449
    %481 = vmatpush1.bf16.msra.mxu0 %v448
    %482 = vmatprep.subr.bf16.mxu0 %v451
    %483 = vmatpush1.bf16.msra.mxu0 %v450
    %484 = vmatprep.subr.bf16.mxu0 %v453
    %485 = vmatpush1.bf16.msra.mxu0 %v452
    %486 = vmatprep.subr.bf16.mxu0 %v455
    %487 = vmatpush1.bf16.msra.mxu0 %v454
    %488 = vmatprep.subr.bf16.mxu0 %v457
    %489 = vmatpush1.bf16.msra.mxu0 %v456
    %490 = vmatprep.subr.bf16.mxu0 %v459
    %491 = vmatpush1.bf16.msra.mxu0 %v458
    %492 = vmatprep.subr.bf16.mxu0 %v461
    %493 = vmatpush1.bf16.msra.mxu0 %v460
    %494 = vmatprep.subr.bf16.mxu0 %v463
    %495 = vmatpush1.bf16.msra.mxu0 %v462
    %496 = vmatprep.subr.bf16.mxu0 0
    %497 = vmatpush1.bf16.msra.mxu0 0
    %498 = vmatprep.subr.bf16.mxu0 0
    %499 = vmatpush1.bf16.msra.mxu0 0
    %500 = vmatprep.subr.bf16.mxu0 0
    %501 = vmatpush1.bf16.msra.mxu0 0
    %502 = vmatprep.subr.bf16.mxu0 0
    %503 = vmatpush1.bf16.msra.mxu0 0
    %504 = vmatprep.subr.bf16.mxu0 0
    %505 = vmatpush1.bf16.msra.mxu0 0
    %506 = vmatprep.subr.bf16.mxu0 0
    %507 = vmatpush1.bf16.msra.mxu0 0
    %508 = vmatprep.subr.bf16.mxu0 0
    %509 = vmatpush1.bf16.msra.mxu0 0
    %510 = vmatprep.subr.bf16.mxu0 0
    %511 = vmatpush1.bf16.msra.mxu0 0
    %512 = vmatprep.mubr.bf16.mxu0 0
    %513 = vmatmul.mubr.bf16.gmra.mrb[0].mxu0 %v383
    %v514 = vpop.f32.mrb[0].mxu0
    %v515 = vadd.f32 0.0, %v514
    %v516 = vpop.f32.mrb[0].mxu0
    %v517 = vadd.f32 0.0, %v516
    %v518 = vpop.f32.mrb[0].mxu0
    %v519 = vpop.f32.mrb[0].mxu0
    %520 = vdwg.mxu0
    %v521 = vld [vmem:[%s5 + $0x2] sm:$0x1]
    %v522 = vlaneseq
    %v523 = vshrl.u32 %v522, 7
    %v524 = vsub.s32 0, %v523
    %v525 = vrot.slane %v521, %v524
    %v526 = vadd.f32 %v515, %v525
    %v527 = vmax.f32 %v526, 0.0
    %v528 = vadd.f32 %v517, %v182
    %v529 = vld [vmem:[%s5 + $0x3] sm:$0x1]
    %v530 = vlaneseq
    %v531 = vshrl.u32 %v530, 7
    %v532 = vsub.s32 0, %v531
    %v533 = vrot.slane %v529, %v532
    %v534 = vadd.f32 %v528, %v533
    %v535 = vmax.f32 %v534, 0.0
    %v536 = vpack.c.bf16 %v527, %v527
    %v537 = vld [vmem:[#allocation2 + $0x14] sm:$0xf]
    %v538 = vld [vmem:[#allocation2 + $0x30] sm:$0xf]
    %v539 = vld [vmem:[#allocation2 + $0x4c] sm:$0xf]
    %v540 = vld [vmem:[#allocation2 + $0x68] sm:$0xf]
    %v541 = vld [vmem:[#allocation2 + $0x84] sm:$0xf]
    %v542 = vld [vmem:[#allocation2 + $0xa0] sm:$0xf]
    %v543 = vld [vmem:[#allocation2 + $0xbc] sm:$0xf]
    %v544 = vld [vmem:[#allocation2 + $0xd8] sm:$0xf]
    %v545 = vld [vmem:[#allocation2 + $0xf4] sm:$0xf]
    %v546 = vld [vmem:[#allocation2 + $0x110] sm:$0xf]
    %v547 = vld [vmem:[#allocation2 + $0x12c] sm:$0xf]
    %v548 = vld [vmem:[#allocation2 + $0x148] sm:$0xf]
    %v549 = vld [vmem:[#allocation2 + $0x164] sm:$0xf]
    %v550 = vld [vmem:[#allocation2 + $0x180] sm:$0xf]
    %v551 = vld [vmem:[#allocation2 + $0x19c] sm:$0xf]
    %v552 = vld [vmem:[#allocation2 + $0x1b8] sm:$0xf]
    %v553 = vpack.c.bf16 %v535, %v535
    %v554 = vld [vmem:[#allocation2 + $0x18] sm:$0xf]
    %v555 = vld [vmem:[#allocation2 + $0x34] sm:$0xf]
    %v556 = vld [vmem:[#allocation2 + $0x50] sm:$0xf]
    %v557 = vld [vmem:[#allocation2 + $0x6c] sm:$0xf]
    %v558 = vld [vmem:[#allocation2 + $0x88] sm:$0xf]
    %v559 = vld [vmem:[#allocation2 + $0xa4] sm:$0xf]
    %v560 = vld [vmem:[#allocation2 + $0xc0] sm:$0xf]
    %v561 = vld [vmem:[#allocation2 + $0xdc] sm:$0xf]
    %v562 = vld [vmem:[#allocation2 + $0xf8] sm:$0xf]
    %v563 = vld [vmem:[#allocation2 + $0x114] sm:$0xf]
    %v564 = vld [vmem:[#allocation2 + $0x130] sm:$0xf]
    %v565 = vld [vmem:[#allocation2 + $0x14c] sm:$0xf]
    %v566 = vld [vmem:[#allocation2 + $0x168] sm:$0xf]
    %v567 = vld [vmem:[#allocation2 + $0x184] sm:$0xf]
    %v568 = vld [vmem:[#allocation2 + $0x1a0] sm:$0xf]
    %v569 = vld [vmem:[#allocation2 + $0x1bc] sm:$0xf]
    %v586 = vunpack.c.l.b16 %v554
    %v587 = vunpack.c.l.b16 %v555
    %v588 = vunpack.c.l.b16 %v556
    %v589 = vunpack.c.l.b16 %v557
    %v590 = vunpack.c.l.b16 %v558
    %v591 = vunpack.c.l.b16 %v559
    %v592 = vunpack.c.l.b16 %v560
    %v593 = vunpack.c.l.b16 %v561
    %v594 = vunpack.c.l.b16 %v562
    %v595 = vunpack.c.l.b16 %v563
    %v596 = vunpack.c.l.b16 %v564
    %v597 = vunpack.c.l.b16 %v565
    %v598 = vunpack.c.l.b16 %v566
    %v599 = vunpack.c.l.b16 %v567
    %v600 = vunpack.c.l.b16 %v568
    %v601 = vunpack.c.l.b16 %v569
    %v602 = vpack.c.b16 %v587, %v586
    %v603 = vpack.c.b16 %v589, %v588
    %v604 = vpack.c.b16 %v591, %v590
    %v605 = vpack.c.b16 %v593, %v592
    %v606 = vpack.c.b16 %v595, %v594
    %v607 = vpack.c.b16 %v597, %v596
    %v608 = vpack.c.b16 %v599, %v598
    %v609 = vpack.c.b16 %v601, %v600
    %618 = vmatprep.subr.bf16.mxu0 0
    %619 = vmatpush1.bf16.msra.mxu0 %v602
    %620 = vmatprep.subr.bf16.mxu0 0
    %621 = vmatpush1.bf16.msra.mxu0 %v603
    %622 = vmatprep.subr.bf16.mxu0 0
    %623 = vmatpush1.bf16.msra.mxu0 %v604
    %624 = vmatprep.subr.bf16.mxu0 0
    %625 = vmatpush1.bf16.msra.mxu0 %v605
    %626 = vmatprep.subr.bf16.mxu0 0
    %627 = vmatpush1.bf16.msra.mxu0 %v606
    %628 = vmatprep.subr.bf16.mxu0 0
    %629 = vmatpush1.bf16.msra.mxu0 %v607
    %630 = vmatprep.subr.bf16.mxu0 0
    %631 = vmatpush1.bf16.msra.mxu0 %v608
    %632 = vmatprep.subr.bf16.mxu0 0
    %633 = vmatpush1.bf16.msra.mxu0 %v609
    %634 = vmatprep.subr.bf16.mxu0 0
    %635 = vmatpush1.bf16.msra.mxu0 0
    %636 = vmatprep.subr.bf16.mxu0 0
    %637 = vmatpush1.bf16.msra.mxu0 0
    %638 = vmatprep.subr.bf16.mxu0 0
    %639 = vmatpush1.bf16.msra.mxu0 0
    %640 = vmatprep.subr.bf16.mxu0 0
    %641 = vmatpush1.bf16.msra.mxu0 0
    %642 = vmatprep.subr.bf16.mxu0 0
    %643 = vmatpush1.bf16.msra.mxu0 0
    %644 = vmatprep.subr.bf16.mxu0 0
    %645 = vmatpush1.bf16.msra.mxu0 0
    %646 = vmatprep.subr.bf16.mxu0 0
    %647 = vmatpush1.bf16.msra.mxu0 0
    %648 = vmatprep.subr.bf16.mxu0 0
    %649 = vmatpush1.bf16.msra.mxu0 0
    %650 = vmatprep.mubr.bf16.mxu0 0
    %651 = vmatmul.mubr.bf16.gmra.mrb[0].mxu0 %v553
    %v652 = vpop.f32.mrb[0].mxu0
    %v653 = vadd.f32 0.0, %v652
    %v654 = vpop.f32.mrb[0].mxu0
    %v655 = vpop.f32.mrb[0].mxu0
    %v656 = vpop.f32.mrb[0].mxu0
    %657 = vdwg.mxu0
    %v674 = vunpack.c.l.b16 %v537
    %v675 = vunpack.c.l.b16 %v538
    %v676 = vunpack.c.l.b16 %v539
    %v677 = vunpack.c.l.b16 %v540
    %v678 = vunpack.c.l.b16 %v541
    %v679 = vunpack.c.l.b16 %v542
    %v680 = vunpack.c.l.b16 %v543
    %v681 = vunpack.c.l.b16 %v544
    %v682 = vunpack.c.l.b16 %v545
    %v683 = vunpack.c.l.b16 %v546
    %v684 = vunpack.c.l.b16 %v547
    %v685 = vunpack.c.l.b16 %v548
    %v686 = vunpack.c.l.b16 %v549
    %v687 = vunpack.c.l.b16 %v550
    %v688 = vunpack.c.l.b16 %v551
    %v689 = vunpack.c.l.b16 %v552
    %v690 = vpack.c.b16 %v675, %v674
    %v691 = vpack.c.b16 %v677, %v676
    %v692 = vpack.c.b16 %v679, %v678
    %v693 = vpack.c.b16 %v681, %v680
    %v694 = vpack.c.b16 %v683, %v682
    %v695 = vpack.c.b16 %v685, %v684
    %v696 = vpack.c.b16 %v687, %v686
    %v697 = vpack.c.b16 %v689, %v688
    %706 = vmatprep.subr.bf16.mxu0 0
    %707 = vmatpush1.bf16.msra.mxu0 %v690
    %708 = vmatprep.subr.bf16.mxu0 0
    %709 = vmatpush1.bf16.msra.mxu0 %v691
    %710 = vmatprep.subr.bf16.mxu0 0
    %711 = vmatpush1.bf16.msra.mxu0 %v692
    %712 = vmatprep.subr.bf16.mxu0 0
    %713 = vmatpush1.bf16.msra.mxu0 %v693
    %714 = vmatprep.subr.bf16.mxu0 0
    %715 = vmatpush1.bf16.msra.mxu0 %v694
    %716 = vmatprep.subr.bf16.mxu0 0
    %717 = vmatpush1.bf16.msra.mxu0 %v695
    %718 = vmatprep.subr.bf16.mxu0 0
    %719 = vmatpush1.bf16.msra.mxu0 %v696
    %720 = vmatprep.subr.bf16.mxu0 0
    %721 = vmatpush1.bf16.msra.mxu0 %v697
    %722 = vmatprep.subr.bf16.mxu0 0
    %723 = vmatpush1.bf16.msra.mxu0 0
    %724 = vmatprep.subr.bf16.mxu0 0
    %725 = vmatpush1.bf16.msra.mxu0 0
    %726 = vmatprep.subr.bf16.mxu0 0
    %727 = vmatpush1.bf16.msra.mxu0 0
    %728 = vmatprep.subr.bf16.mxu0 0
    %729 = vmatpush1.bf16.msra.mxu0 0
    %730 = vmatprep.subr.bf16.mxu0 0
    %731 = vmatpush1.bf16.msra.mxu0 0
    %732 = vmatprep.subr.bf16.mxu0 0
    %733 = vmatpush1.bf16.msra.mxu0 0
    %734 = vmatprep.subr.bf16.mxu0 0
    %735 = vmatpush1.bf16.msra.mxu0 0
    %736 = vmatprep.subr.bf16.mxu0 0
    %737 = vmatpush1.bf16.msra.mxu0 0
    %738 = vmatprep.mubr.bf16.mxu0 0
    %739 = vmatmul.mubr.bf16.gmra.mrb[0].mxu0 %v536
    %v740 = vpop.f32.mrb[0].mxu0
    %v741 = vadd.f32 %v653, %v740
    %v742 = vpop.f32.mrb[0].mxu0
    %v743 = vpop.f32.mrb[0].mxu0
    %v744 = vpop.f32.mrb[0].mxu0
    %745 = vdwg.mxu0
    %v746 = vld [vmem:[%s5 + $0x4] sm:$0x1]
    %v747 = vlaneseq
    %v748 = vshrl.u32 %v747, 7
    %v749 = vsub.s32 0, %v748
    %v750 = vrot.slane %v746, %v749
    %v751 = vadd.f32 %v741, %v750
    %753 = vrot.lane.b32.xlu0 %v380, 84
    %v754 = vpop.permute.xlu0 %753
    %vm756 = vcmask 687104
    %v757 = vsel %vm756, 0.0, %v754
    %vm758 = vcmask 752640
    %v759 = vsel %vm758, %v757, 0.0
    %v760 = vadd.f32 %v331, %v751
    %v761 = vadd.f32 %v760, %v759
    %762 = vst [vmem:[%s6] sm:$0xff] %v761
    // Predicated region
    $region30: #{mixture_gaussian_vae_forward.3} parent=1 // pred_check
      _
    $region31: #{mixture_gaussian_vae_forward.3} parent=1 // pred_check_branch
      %764 = sbr.rel (0) target = $region33
    $region32: #{mixture_gaussian_vae_forward.3} parent=1 // pred_region
      _
    $region33: #{mixture_gaussian_vae_forward.3} parent=1 // pred_fallthru
      _
    // Predicated region
    $region34: #{mixture_gaussian_vae_forward.3} parent=1 // pred_check
      _
    $region35: #{mixture_gaussian_vae_forward.3} parent=1 // pred_check_branch
      %766 = sbr.rel (0) target = $region37
    $region36: #{mixture_gaussian_vae_forward.3} parent=1 // pred_region
      _
    $region37: #{mixture_gaussian_vae_forward.3} parent=1 // pred_fallthru
      _
    %767 = vsyncpa [#allocation3], 1

</llo_original>
